<compile_context>
chip_gen: v7x
topology: tpu7x:2x2x1
jax: 0.10.0
libtpu: 0.0.40
codegen_flags: <defaults>
</compile_context>

<pallas_src>
import functools

import numpy as np
import jax
import jax.numpy as jnp
from jax.experimental import pallas as pl
from jax.experimental.pallas import tpu as pltpu


# ---------------------------------------------------------------------------
# Kernel: one batch tile of the dual GCN per grid step; discriminators in the
# final step.  All matmul operands are bf16, accumulation f32.
# ---------------------------------------------------------------------------
def fused_model_kernel(seq_ref, adj_ref, w_gcn_ref, b_gcn_ref, alpha_ref,
                       wc_ref, wp_ref, bias_row_ref, sel_c_ref, sel_p_ref,
                       out_ref, last_sc, pen_sc, c_sc):
    f32 = jnp.float32
    bf16 = jnp.bfloat16

    i = pl.program_id(0)
    n_steps = pl.num_programs(0)
    tile_b, N, _ = adj_ref.shape
    n_f = w_gcn_ref.shape[1]            # 128-padded [ctx | patch | zeros] lanes
    B = last_sc.shape[0]

    # ---- dual GCN on this batch tile --------------------------------------
    # seq tile arrives pre-flattened: (tile_b*N, n_in) bf16.
    fts = jnp.dot(seq_ref[...], w_gcn_ref[...], preferred_element_type=f32)
    fts = fts.reshape(tile_b, N, n_f).astype(bf16)       # lane dim stays 128
    pre = jnp.einsum('bnm,bmf->bnf', adj_ref[...], fts,
                     preferred_element_type=f32)
    pre = pre + b_gcn_ref[...]                           # (tile_b, N, n_f) f32
    # PReLU in f32 on the VPU (padded lanes are exactly zero -> stay zero).
    act = jnp.where(pre > 0, pre, alpha_ref[...] * pre)

    # Only the rows the model actually consumes.
    last = act[:, N - 1, :]                              # [ h_mv | h_unano ]
    pen = act[:, N - 2, :]                               # [  .   | h_ano   ]
    # mean over nodes 0..N-2  == (sum over all rows - last row) / (N-1)
    c_rows = (jnp.sum(act, axis=1) - last) * (1.0 / (N - 1))   # [ c | . ]

    row0 = pl.multiple_of(i * tile_b, tile_b)
    last_sc[pl.ds(row0, tile_b), :] = last
    pen_sc[pl.ds(row0, tile_b), :] = pen
    c_sc[pl.ds(row0, tile_b), :] = c_rows

    # ---- final step: both bilinear discriminators, one lane-dense row ------
    @pl.when(i == n_steps - 1)
    def _():
        kc1b = sel_c_ref.shape[0]        # (negsamp_ctx + 1) * B
        kp1b = sel_p_ref.shape[0]        # (negsamp_patch + 1) * B
        ktot = kc1b + kp1b

        last_all = last_sc[...].astype(bf16)             # (B, n_f)
        # h @ W  (computed once, padded weights keep branches lane-separated)
        hw_c = jnp.dot(last_all, wc_ref[...], preferred_element_type=f32)
        hw_p = jnp.dot(last_all, wp_ref[...], preferred_element_type=f32)
        # shifted negative samples via tiny one-hot selection matmuls
        rhs_c = jnp.dot(sel_c_ref[...], c_sc[...].astype(bf16),
                        preferred_element_type=f32)      # (kc1b, n_f)
        rhs_p = jnp.dot(sel_p_ref[...], pen_sc[...].astype(bf16),
                        preferred_element_type=f32)      # (kp1b, n_f)
        # lhs is just hw tiled (rounds+1)x along batch (no one-hot matmul).
        lhs_c = jnp.concatenate([hw_c] * (kc1b // B), axis=0)
        lhs_p = jnp.concatenate([hw_p] * (kp1b // B), axis=0)

        prod = jnp.concatenate([lhs_c * rhs_c, lhs_p * rhs_p], axis=0)
        # Lane-wise reduce expressed as a 1xF ones-contraction so the scores
        # land lane-dense in a (1, ktot) row (no (K,1) masked column stores).
        ones_f = jnp.ones((1, n_f), f32)
        scores = jax.lax.dot_general(
            ones_f, prod, (((1,), (1,)), ((), ())),
            preferred_element_type=f32)                  # (1, ktot)

        pad = out_ref.shape[1] - ktot
        if pad > 0:
            scores = jnp.concatenate(
                [scores, jnp.zeros((1, pad), f32)], axis=1)
        out_ref[...] = scores + bias_row_ref[...]        # adds both biases


# ---------------------------------------------------------------------------
# Wrapper: batch grid, resident weights, single lane-dense output row.
# ---------------------------------------------------------------------------
@functools.partial(jax.jit, static_argnames=("tile_b",))
def model_forward(fused, seq1, adj, tile_b=None):
    B, N, n_in = seq1.shape
    n_f = fused["w_gcn"].shape[1]
    kc1b = fused["sel_c"].shape[0]
    kp1b = fused["sel_p"].shape[0]
    l_pad = fused["disc_bias_row"].shape[1]

    if tile_b is None:
        tile_b = B
    assert B % tile_b == 0, "tile_b must divide B"
    grid = (B // tile_b,)

    # Layout plumbing done in the wrapper (free): flatten seq, cast to bf16.
    seq_flat = seq1.reshape(B * N, n_in).astype(jnp.bfloat16)
    adj_bf = adj.astype(jnp.bfloat16)

    out_row = pl.pallas_call(
        fused_model_kernel,
        out_shape=jax.ShapeDtypeStruct((1, l_pad), jnp.float32),
        grid_spec=pltpu.PrefetchScalarGridSpec(
            num_scalar_prefetch=0,
            grid=grid,
            in_specs=[
                pl.BlockSpec((tile_b * N, n_in), lambda i: (i, 0)),   # seq
                pl.BlockSpec((tile_b, N, N), lambda i: (i, 0, 0)),    # adj
                pl.BlockSpec((n_in, n_f), lambda i: (0, 0)),          # w_gcn
                pl.BlockSpec((1, n_f), lambda i: (0, 0)),             # b_gcn
                pl.BlockSpec((1, n_f), lambda i: (0, 0)),             # alpha
                pl.BlockSpec((n_f, n_f), lambda i: (0, 0)),           # wc_pad
                pl.BlockSpec((n_f, n_f), lambda i: (0, 0)),           # wp_pad
                pl.BlockSpec((1, l_pad), lambda i: (0, 0)),           # bias row
                pl.BlockSpec((kc1b, B), lambda i: (0, 0)),            # sel_c
                pl.BlockSpec((kp1b, B), lambda i: (0, 0)),            # sel_p
            ],
            out_specs=pl.BlockSpec((1, l_pad), lambda i: (0, 0)),
            scratch_shapes=[
                pltpu.VMEM((B, n_f), jnp.float32),    # last-node rows
                pltpu.VMEM((B, n_f), jnp.float32),    # 2nd-last-node rows
                pltpu.VMEM((B, n_f), jnp.float32),    # avg-readout rows
            ],
        ),
        # Batch axis must be sequential: the final step's negative-sample
        # shift reads every batch row accumulated in scratch.
        compiler_params=pltpu.CompilerParams(
            dimension_semantics=("arbitrary",)),
    )(seq_flat, adj_bf,
      fused["w_gcn"], fused["b_gcn"], fused["alpha_row"],
      fused["wc_pad"], fused["wp_pad"], fused["disc_bias_row"],
      fused["sel_c"], fused["sel_p"])

    ret1 = out_row[0, :kc1b].reshape(kc1b, 1)
    ret2 = out_row[0, kc1b:kc1b + kp1b].reshape(kp1b, 1)
    return ret1, ret2


# ---------------------------------------------------------------------------
# Static negative-sample shift as a one-hot selection matrix:
#   x_mi <- cat(x_mi[-2:-1], x_mi[:-1])   repeated `rounds` times.
# ---------------------------------------------------------------------------
def make_shift_matrix(B, rounds):
    idx = list(range(B))
    maps = [list(idx)]
    for _ in range(rounds):
        idx = [idx[B - 2]] + idx[:B - 1]
        maps.append(list(idx))
    k1 = rounds + 1
    sel = np.zeros((k1 * B, B), np.float32)
    for k in range(k1):
        for b in range(B):
            sel[k * B + b, maps[k][b]] = 1.0
    return jnp.asarray(sel)


# ---------------------------------------------------------------------------
# Parameters: raw (PyTorch-convention) init, then one-time fused layout prep.
# ---------------------------------------------------------------------------
def init_params(key, n_in, n_h):
    k1, k2, k3, k4 = jax.random.split(key, 4)

    def xavier(k, shape, fan_in, fan_out):
        bound = float(np.sqrt(6.0 / (fan_in + fan_out)))
        return jax.random.uniform(k, shape, jnp.float32, -bound, bound)

    return {
        "w_ctx": xavier(k1, (n_h, n_in), n_in, n_h),       # Linear (out, in)
        "w_patch": xavier(k2, (n_h, n_in), n_in, n_h),
        "b_ctx": jnp.zeros((n_h,), jnp.float32),
        "b_patch": jnp.zeros((n_h,), jnp.float32),
        "a_ctx": jnp.asarray(0.25, jnp.float32),           # PReLU default
        "a_patch": jnp.asarray(0.25, jnp.float32),
        "w_cdisc": xavier(k3, (n_h, n_h), n_h * n_h, n_h),  # Bilinear weight[0]
        "w_pdisc": xavier(k4, (n_h, n_h), n_h * n_h, n_h),
        "b_cdisc": jnp.asarray(0.0, jnp.float32),
        "b_pdisc": jnp.asarray(0.0, jnp.float32),
    }


def prepare_params(raw, B, negsamp_ctx, negsamp_patch):
    n_h, n_in = raw["w_ctx"].shape
    n_h2 = 2 * n_h
    n_f = ((n_h2 + 127) // 128) * 128           # pad fused lanes to 128

    # Fused + lane-padded GCN weight / bias / PReLU alphas  (ctx | patch | 0).
    w_gcn = (jnp.zeros((n_in, n_f), jnp.float32)
             .at[:, :n_h].set(raw["w_ctx"].T)
             .at[:, n_h:n_h2].set(raw["w_patch"].T))
    b_gcn = (jnp.zeros((1, n_f), jnp.float32)
             .at[0, :n_h].set(raw["b_ctx"])
             .at[0, n_h:n_h2].set(raw["b_patch"]))
    alpha_row = (jnp.zeros((1, n_f), jnp.float32)
                 .at[0, :n_h].set(raw["a_ctx"])
                 .at[0, n_h:n_h2].set(raw["a_patch"]))
    # Zero-padded bilinear weights on the fused lane layout.
    wc_pad = (jnp.zeros((n_f, n_f), jnp.float32)
              .at[:n_h, :n_h].set(raw["w_cdisc"]))
    wp_pad = (jnp.zeros((n_f, n_f), jnp.float32)
              .at[n_h:n_h2, n_h:n_h2].set(raw["w_pdisc"]))

    kc1b = (negsamp_ctx + 1) * B
    kp1b = (negsamp_patch + 1) * B
    l_pad = ((kc1b + kp1b + 127) // 128) * 128
    bias_row = (jnp.zeros((1, l_pad), jnp.float32)
                .at[0, :kc1b].set(raw["b_cdisc"])
                .at[0, kc1b:kc1b + kp1b].set(raw["b_pdisc"]))

    return dict(
        w_gcn=w_gcn.astype(jnp.bfloat16),
        b_gcn=b_gcn,
        alpha_row=alpha_row,
        wc_pad=wc_pad.astype(jnp.bfloat16),
        wp_pad=wp_pad.astype(jnp.bfloat16),
        disc_bias_row=bias_row,
        sel_c=make_shift_matrix(B, negsamp_ctx).astype(jnp.bfloat16),
        sel_p=make_shift_matrix(B, negsamp_patch).astype(jnp.bfloat16),
    )


# ---------------------------------------------------------------------------
# Pure-JAX reference (mirrors the PyTorch module, dense / 'avg' readout).
# TODO(synk): sparse=True (torch.spmm) path and max/min/weighted_sum readouts
#             are not implemented; the module's default forward uses neither.
# ---------------------------------------------------------------------------
def reference_forward(raw, seq1, adj, negsamp_ctx, negsamp_patch):
    def gcn(w, b, a):
        fts = jnp.einsum('bni,hi->bnh', seq1, w)
        out = jnp.einsum('bnm,bmh->bnh', adj, fts) + b
        return jnp.where(out > 0, out, a * out)

    h1 = gcn(raw["w_ctx"], raw["b_ctx"], raw["a_ctx"])
    h2 = gcn(raw["w_patch"], raw["b_patch"], raw["a_patch"])
    c = jnp.mean(h1[:, :-1, :], axis=1)
    h_mv, h_unano, h_ano = h1[:, -1, :], h2[:, -1, :], h2[:, -2, :]

    def disc(x1, x2, w, bias, rounds):
        def score(y2):
            return jnp.einsum('bi,ij,bj->b', x1, w, y2)[:, None] + bias
        scs = [score(x2)]
        cur = x2
        for _ in range(rounds):
            cur = jnp.concatenate([cur[-2:-1, :], cur[:-1, :]], axis=0)
            scs.append(score(cur))
        return jnp.concatenate(scs, axis=0)

    ret1 = disc(h_mv, c, raw["w_cdisc"], raw["b_cdisc"], negsamp_ctx)
    ret2 = disc(h_unano, h_ano, raw["w_pdisc"], raw["b_pdisc"], negsamp_patch)
    return ret1, ret2


if __name__ == "__main__":
    B, N, n_in, n_h = 4, 8, 16, 32
    negsamp_patch, negsamp_ctx = 2, 2

    key = jax.random.PRNGKey(0)
    kparam, kseq, kadj = jax.random.split(key, 3)

    raw = init_params(kparam, n_in, n_h)
    fused = prepare_params(raw, B, negsamp_ctx, negsamp_patch)

    seq1 = jax.random.normal(kseq, (B, N, n_in), jnp.float32)
    a = jax.random.uniform(kadj, (B, N, N), jnp.float32)
    adj = (a + jnp.swapaxes(a, 1, 2)) * 0.5
    adj = adj / jnp.sum(adj, axis=-1, keepdims=True)

    # tile_b=2 -> grid of 2 batch tiles (exercises the pipelined batch grid).
    ret1, ret2 = model_forward(fused, seq1, adj, tile_b=2)
    jax.block_until_ready((ret1, ret2))

    assert ret1.shape == ((negsamp_ctx + 1) * B, 1)
    assert ret2.shape == ((negsamp_patch + 1) * B, 1)

    ref1, ref2 = reference_forward(raw, seq1, adj, negsamp_ctx, negsamp_patch)
    np.testing.assert_allclose(np.asarray(ret1), np.asarray(ref1),
                               rtol=5e-2, atol=2e-2)
    np.testing.assert_allclose(np.asarray(ret2), np.asarray(ref2),
                               rtol=5e-2, atol=2e-2)

    print("KERNEL_OK")
</pallas_src>

<mosaic_0001>
module attributes {stable_mosaic.version = 11 : i64} {
  func.func @fused_model_kernel(%arg0: i32, %arg1: memref<16x16xbf16, #tpu.memory_space<vmem>>, %arg2: memref<2x8x8xbf16, #tpu.memory_space<vmem>>, %arg3: memref<16x128xbf16, #tpu.memory_space<vmem>>, %arg4: memref<1x128xf32, #tpu.memory_space<vmem>>, %arg5: memref<1x128xf32, #tpu.memory_space<vmem>>, %arg6: memref<128x128xbf16, #tpu.memory_space<vmem>>, %arg7: memref<128x128xbf16, #tpu.memory_space<vmem>>, %arg8: memref<1x128xf32, #tpu.memory_space<vmem>>, %arg9: memref<12x4xbf16, #tpu.memory_space<vmem>>, %arg10: memref<12x4xbf16, #tpu.memory_space<vmem>>, %arg11: memref<1x128xf32, #tpu.memory_space<vmem>>, %arg12: memref<4x128xf32, #tpu.memory_space<vmem>>, %arg13: memref<4x128xf32, #tpu.memory_space<vmem>>, %arg14: memref<4x128xf32, #tpu.memory_space<vmem>>) attributes {dimension_semantics = [#tpu.dimension_semantics<arbitrary>], iteration_bounds = array<i64: 2>, scalar_prefetch = 0 : i64, scratch_operands = 3 : i64, tpu.core_type = #tpu.core_type<tc>, window_params = [{transform_indices = @transform_0, window_bounds = array<i64: 16, 16>}, {transform_indices = @transform_1, window_bounds = array<i64: 2, 8, 8>}, {pipeline_mode = #tpu.pipeline_mode<synchronous>, transform_indices = @transform_2, window_bounds = array<i64: 16, 128>}, {pipeline_mode = #tpu.pipeline_mode<synchronous>, transform_indices = @transform_3, window_bounds = array<i64: 1, 128>}, {pipeline_mode = #tpu.pipeline_mode<synchronous>, transform_indices = @transform_4, window_bounds = array<i64: 1, 128>}, {pipeline_mode = #tpu.pipeline_mode<synchronous>, transform_indices = @transform_5, window_bounds = array<i64: 128, 128>}, {pipeline_mode = #tpu.pipeline_mode<synchronous>, transform_indices = @transform_6, window_bounds = array<i64: 128, 128>}, {pipeline_mode = #tpu.pipeline_mode<synchronous>, transform_indices = @transform_7, window_bounds = array<i64: 1, 128>}, {pipeline_mode = #tpu.pipeline_mode<synchronous>, transform_indices = @transform_8, window_bounds = array<i64: 12, 4>}, {pipeline_mode = #tpu.pipeline_mode<synchronous>, transform_indices = @transform_9, window_bounds = array<i64: 12, 4>}, {pipeline_mode = #tpu.pipeline_mode<synchronous>, transform_indices = @transform_10, window_bounds = array<i64: 1, 128>}]} {
    %c0 = arith.constant 0 : index
    %c0_0 = arith.constant 0 : index
    %0 = vector.load %arg1[%c0, %c0_0] : memref<16x16xbf16, #tpu.memory_space<vmem>>, vector<16x16xbf16>
    %c0_1 = arith.constant 0 : index
    %c0_2 = arith.constant 0 : index
    %1 = vector.load %arg3[%c0_1, %c0_2] : memref<16x128xbf16, #tpu.memory_space<vmem>>, vector<16x128xbf16>
    %cst = arith.constant dense<0.000000e+00> : vector<16x128xf32>
    %2 = tpu.matmul %0, %1, %cst {dimension_numbers = #tpu.dot_dimension_numbers<[1], [0], [0], [1], [0, 0, 1, 1], [], []>} : vector<16x16xbf16>, vector<16x128xbf16>, vector<16x128xf32> -> vector<16x128xf32>
    %3 = vector.shape_cast %2 : vector<16x128xf32> to vector<2x8x128xf32>
    %4 = arith.truncf %3 : vector<2x8x128xf32> to vector<2x8x128xbf16>
    %c0_3 = arith.constant 0 : index
    %c0_4 = arith.constant 0 : index
    %c0_5 = arith.constant 0 : index
    %5 = vector.load %arg2[%c0_3, %c0_4, %c0_5] : memref<2x8x8xbf16, #tpu.memory_space<vmem>>, vector<2x8x8xbf16>
    "tpu.trace_start"() <{level = 10 : i32, message = "bnm,bmf->bnf"}> : () -> ()
    %cst_6 = arith.constant dense<0.000000e+00> : vector<2x8x128xf32>
    %6 = tpu.matmul %5, %4, %cst_6 {dimension_numbers = #tpu.dot_dimension_numbers<[2], [1], [1], [2], [0, 0, 0, 1, 1, 2], [0], [0]>} : vector<2x8x8xbf16>, vector<2x8x128xbf16>, vector<2x8x128xf32> -> vector<2x8x128xf32>
    "tpu.trace_stop"() : () -> ()
    %c0_7 = arith.constant 0 : index
    %c0_8 = arith.constant 0 : index
    %7 = vector.load %arg4[%c0_7, %c0_8] : memref<1x128xf32, #tpu.memory_space<vmem>>, vector<1x128xf32>
    %8 = vector.shape_cast %7 : vector<1x128xf32> to vector<1x1x128xf32>
    %9 = vector.broadcast %8 : vector<1x1x128xf32> to vector<2x8x128xf32>
    %10 = arith.addf %6, %9 : vector<2x8x128xf32>
    %cst_9 = arith.constant 0.000000e+00 : f32
    %11 = vector.broadcast %cst_9 : f32 to vector<2x8x128xf32>
    %12 = arith.cmpf ogt, %10, %11 : vector<2x8x128xf32>
    %c0_10 = arith.constant 0 : index
    %c0_11 = arith.constant 0 : index
    %13 = vector.load %arg5[%c0_10, %c0_11] : memref<1x128xf32, #tpu.memory_space<vmem>>, vector<1x128xf32>
    %14 = vector.shape_cast %13 : vector<1x128xf32> to vector<1x1x128xf32>
    %15 = vector.broadcast %14 : vector<1x1x128xf32> to vector<2x8x128xf32>
    %16 = arith.mulf %15, %10 : vector<2x8x128xf32>
    %17 = arith.select %12, %10, %16 : vector<2x8x128xi1>, vector<2x8x128xf32>
    %18 = vector.extract_strided_slice %17 {offsets = [0, 7, 0], sizes = [2, 1, 128], strides = [1, 1, 1]} : vector<2x8x128xf32> to vector<2x1x128xf32>
    %19 = vector.shape_cast %18 : vector<2x1x128xf32> to vector<2x128xf32>
    %20 = vector.extract_strided_slice %17 {offsets = [0, 6, 0], sizes = [2, 1, 128], strides = [1, 1, 1]} : vector<2x8x128xf32> to vector<2x1x128xf32>
    %21 = vector.shape_cast %20 : vector<2x1x128xf32> to vector<2x128xf32>
    %cst_12 = arith.constant dense<0.000000e+00> : vector<2x128xf32>
    %22 = vector.multi_reduction <add>, %17, %cst_12 [1] : vector<2x8x128xf32> to vector<2x128xf32>
    %23 = arith.subf %22, %19 : vector<2x128xf32>
    %cst_13 = arith.constant 0.142857149 : f32
    %24 = vector.broadcast %cst_13 : f32 to vector<2x128xf32>
    %25 = arith.mulf %23, %24 : vector<2x128xf32>
    %c2_i32 = arith.constant 2 : i32
    %26 = arith.muli %arg0, %c2_i32 : i32
    %27 = tpu.assume_multiple %26, 2 : i32
    %28 = arith.index_cast %27 : i32 to index
    %c0_14 = arith.constant 0 : index
    %29 = vector.load %arg12[%28, %c0_14] : memref<4x128xf32, #tpu.memory_space<vmem>>, vector<2x128xf32>
    tpu.vector_store %arg12[%28, %c0_14], %19 {strides = array<i32>} : memref<4x128xf32, #tpu.memory_space<vmem>>, vector<2x128xf32>,
    %30 = arith.index_cast %27 : i32 to index
    %c0_15 = arith.constant 0 : index
    %31 = vector.load %arg13[%30, %c0_15] : memref<4x128xf32, #tpu.memory_space<vmem>>, vector<2x128xf32>
    tpu.vector_store %arg13[%30, %c0_15], %21 {strides = array<i32>} : memref<4x128xf32, #tpu.memory_space<vmem>>, vector<2x128xf32>,
    %32 = arith.index_cast %27 : i32 to index
    %c0_16 = arith.constant 0 : index
    %33 = vector.load %arg14[%32, %c0_16] : memref<4x128xf32, #tpu.memory_space<vmem>>, vector<2x128xf32>
    tpu.vector_store %arg14[%32, %c0_16], %25 {strides = array<i32>} : memref<4x128xf32, #tpu.memory_space<vmem>>, vector<2x128xf32>,
    %c1_i32 = arith.constant 1 : i32
    %34 = arith.cmpi eq, %arg0, %c1_i32 : i32
    %35 = arith.extui %34 : i1 to i32
    %c0_i32 = arith.constant 0 : i32
    %36 = arith.cmpi ne, %35, %c0_i32 : i32
    scf.if %36 {
      %c0_17 = arith.constant 0 : index
      %c0_18 = arith.constant 0 : index
      %37 = vector.load %arg12[%c0_17, %c0_18] : memref<4x128xf32, #tpu.memory_space<vmem>>, vector<4x128xf32>
      %38 = arith.truncf %37 : vector<4x128xf32> to vector<4x128xbf16>
      %c0_19 = arith.constant 0 : index
      %c0_20 = arith.constant 0 : index
      %39 = vector.load %arg6[%c0_19, %c0_20] : memref<128x128xbf16, #tpu.memory_space<vmem>>, vector<128x128xbf16>
      %cst_21 = arith.constant dense<0.000000e+00> : vector<4x128xf32>
      %40 = tpu.matmul %38, %39, %cst_21 {dimension_numbers = #tpu.dot_dimension_numbers<[1], [0], [0], [1], [0, 0, 1, 1], [], []>} : vector<4x128xbf16>, vector<128x128xbf16>, vector<4x128xf32> -> vector<4x128xf32>
      %c0_22 = arith.constant 0 : index
      %c0_23 = arith.constant 0 : index
      %41 = vector.load %arg7[%c0_22, %c0_23] : memref<128x128xbf16, #tpu.memory_space<vmem>>, vector<128x128xbf16>
      %cst_24 = arith.constant dense<0.000000e+00> : vector<4x128xf32>
      %42 = tpu.matmul %38, %41, %cst_24 {dimension_numbers = #tpu.dot_dimension_numbers<[1], [0], [0], [1], [0, 0, 1, 1], [], []>} : vector<4x128xbf16>, vector<128x128xbf16>, vector<4x128xf32> -> vector<4x128xf32>
      %c0_25 = arith.constant 0 : index
      %c0_26 = arith.constant 0 : index
      %43 = vector.load %arg9[%c0_25, %c0_26] : memref<12x4xbf16, #tpu.memory_space<vmem>>, vector<12x4xbf16>
      %c0_27 = arith.constant 0 : index
      %c0_28 = arith.constant 0 : index
      %44 = vector.load %arg14[%c0_27, %c0_28] : memref<4x128xf32, #tpu.memory_space<vmem>>, vector<4x128xf32>
      %45 = arith.truncf %44 : vector<4x128xf32> to vector<4x128xbf16>
      %cst_29 = arith.constant dense<0.000000e+00> : vector<12x128xf32>
      %46 = tpu.matmul %43, %45, %cst_29 {dimension_numbers = #tpu.dot_dimension_numbers<[1], [0], [0], [1], [0, 0, 1, 1], [], []>} : vector<12x4xbf16>, vector<4x128xbf16>, vector<12x128xf32> -> vector<12x128xf32>
      %c0_30 = arith.constant 0 : index
      %c0_31 = arith.constant 0 : index
      %47 = vector.load %arg10[%c0_30, %c0_31] : memref<12x4xbf16, #tpu.memory_space<vmem>>, vector<12x4xbf16>
      %c0_32 = arith.constant 0 : index
      %c0_33 = arith.constant 0 : index
      %48 = vector.load %arg13[%c0_32, %c0_33] : memref<4x128xf32, #tpu.memory_space<vmem>>, vector<4x128xf32>
      %49 = arith.truncf %48 : vector<4x128xf32> to vector<4x128xbf16>
      %cst_34 = arith.constant dense<0.000000e+00> : vector<12x128xf32>
      %50 = tpu.matmul %47, %49, %cst_34 {dimension_numbers = #tpu.dot_dimension_numbers<[1], [0], [0], [1], [0, 0, 1, 1], [], []>} : vector<12x4xbf16>, vector<4x128xbf16>, vector<12x128xf32> -> vector<12x128xf32>
      %51 = tpu.concatenate %40, %40, %40 in 0 : vector<4x128xf32>, vector<4x128xf32>, vector<4x128xf32> -> vector<12x128xf32>
      %52 = tpu.concatenate %42, %42, %42 in 0 : vector<4x128xf32>, vector<4x128xf32>, vector<4x128xf32> -> vector<12x128xf32>
      %53 = arith.mulf %51, %46 : vector<12x128xf32>
      %54 = arith.mulf %52, %50 : vector<12x128xf32>
      %55 = tpu.concatenate %53, %54 in 0 : vector<12x128xf32>, vector<12x128xf32> -> vector<24x128xf32>
      %cst_35 = arith.constant 1.000000e+00 : f32
      %56 = vector.broadcast %cst_35 : f32 to vector<1x128xf32>
      %cst_36 = arith.constant dense<0.000000e+00> : vector<1x24xf32>
      %57 = tpu.matmul %56, %55, %cst_36 {dimension_numbers = #tpu.dot_dimension_numbers<[1], [1], [0], [0], [0, 0, 1, 0], [], []>} : vector<1x128xf32>, vector<24x128xf32>, vector<1x24xf32> -> vector<1x24xf32>
      %cst_37 = arith.constant 0.000000e+00 : f32
      %58 = vector.broadcast %cst_37 : f32 to vector<1x104xf32>
      %59 = tpu.concatenate %57, %58 in 1 : vector<1x24xf32>, vector<1x104xf32> -> vector<1x128xf32>
      %c0_38 = arith.constant 0 : index
      %c0_39 = arith.constant 0 : index
      %60 = vector.load %arg8[%c0_38, %c0_39] : memref<1x128xf32, #tpu.memory_space<vmem>>, vector<1x128xf32>
      %61 = arith.addf %59, %60 : vector<1x128xf32>
      %c0_40 = arith.constant 0 : index
      %c0_41 = arith.constant 0 : index
      %62 = vector.load %arg11[%c0_40, %c0_41] : memref<1x128xf32, #tpu.memory_space<vmem>>, vector<1x128xf32>
      tpu.vector_store %arg11[%c0_40, %c0_41], %61 {strides = array<i32>} : memref<1x128xf32, #tpu.memory_space<vmem>>, vector<1x128xf32>,
    } else {
    }
    return
  }
  func.func @transform_0(%arg0: i32) -> (i32, i32) {
    %c0_i32 = arith.constant 0 : i32
    %c0_i32_0 = arith.constant 0 : i32
    return %arg0, %c0_i32 : i32, i32
  }
  func.func @transform_1(%arg0: i32) -> (i32, i32, i32) {
    %c0_i32 = arith.constant 0 : i32
    %c0_i32_0 = arith.constant 0 : i32
    %c0_i32_1 = arith.constant 0 : i32
    return %arg0, %c0_i32, %c0_i32_0 : i32, i32, i32
  }
  func.func @transform_2(%arg0: i32) -> (i32, i32) {
    %c0_i32 = arith.constant 0 : i32
    %c0_i32_0 = arith.constant 0 : i32
    %c0_i32_1 = arith.constant 0 : i32
    return %c0_i32, %c0_i32_0 : i32, i32
  }
  func.func @transform_3(%arg0: i32) -> (i32, i32) {
    %c0_i32 = arith.constant 0 : i32
    %c0_i32_0 = arith.constant 0 : i32
    %c0_i32_1 = arith.constant 0 : i32
    return %c0_i32, %c0_i32_0 : i32, i32
  }
  func.func @transform_4(%arg0: i32) -> (i32, i32) {
    %c0_i32 = arith.constant 0 : i32
    %c0_i32_0 = arith.constant 0 : i32
    %c0_i32_1 = arith.constant 0 : i32
    return %c0_i32, %c0_i32_0 : i32, i32
  }
  func.func @transform_5(%arg0: i32) -> (i32, i32) {
    %c0_i32 = arith.constant 0 : i32
    %c0_i32_0 = arith.constant 0 : i32
    %c0_i32_1 = arith.constant 0 : i32
    return %c0_i32, %c0_i32_0 : i32, i32
  }
  func.func @transform_6(%arg0: i32) -> (i32, i32) {
    %c0_i32 = arith.constant 0 : i32
    %c0_i32_0 = arith.constant 0 : i32
    %c0_i32_1 = arith.constant 0 : i32
    return %c0_i32, %c0_i32_0 : i32, i32
  }
  func.func @transform_7(%arg0: i32) -> (i32, i32) {
    %c0_i32 = arith.constant 0 : i32
    %c0_i32_0 = arith.constant 0 : i32
    %c0_i32_1 = arith.constant 0 : i32
    return %c0_i32, %c0_i32_0 : i32, i32
  }
  func.func @transform_8(%arg0: i32) -> (i32, i32) {
    %c0_i32 = arith.constant 0 : i32
    %c0_i32_0 = arith.constant 0 : i32
    %c0_i32_1 = arith.constant 0 : i32
    return %c0_i32, %c0_i32_0 : i32, i32
  }
  func.func @transform_9(%arg0: i32) -> (i32, i32) {
    %c0_i32 = arith.constant 0 : i32
    %c0_i32_0 = arith.constant 0 : i32
    %c0_i32_1 = arith.constant 0 : i32
    return %c0_i32, %c0_i32_0 : i32, i32
  }
  func.func @transform_10(%arg0: i32) -> (i32, i32) {
    %c0_i32 = arith.constant 0 : i32
    %c0_i32_0 = arith.constant 0 : i32
    %c0_i32_1 = arith.constant 0 : i32
    return %c0_i32, %c0_i32_0 : i32, i32
  }
}

</mosaic_0001>

<llo_original>
// kernel: model_forward.1
$region0: #{model_forward.1}
  #allocation0 [shape = 'u32[]', space=smem, size = 0x4, offset = 0x4, fixed_abs, tag = 'smem constant byte address 0x4 - core index']
  #allocation1 [shape = 'u32[144,128]{1,0:T(1,128)}', space=vmem, size = 0x12000, scoped, tag = 'internal scratch']
  #allocation2 [shape = 'f32[4,128]{1,0:T(4,128)}', space=vmem, size = 0x800, scoped, tag = 'scratch operand']
  #allocation3 [shape = 'f32[4,128]{1,0:T(4,128)}', space=vmem, size = 0x800, scoped, tag = 'scratch operand']
  #allocation4 [shape = 'f32[4,128]{1,0:T(4,128)}', space=vmem, size = 0x800, scoped, tag = 'scratch operand']
  %s0 = inlined_call_operand.vmem [shape: bf16[32,16], index: 0, kind: input, shape index: {}]
  %s1 = inlined_call_operand.vmem [shape: bf16[4,8,8], index: 1, kind: input, shape index: {}]
  %s2 = inlined_call_operand.hbm [shape: bf16[16,128], index: 2, kind: input, shape index: {}]
  %s3 = inlined_call_operand.vmem [shape: f32[1,128], index: 3, kind: input, shape index: {}]
  %s4 = inlined_call_operand.vmem [shape: f32[1,128], index: 4, kind: input, shape index: {}]
  %s5 = inlined_call_operand.vmem [shape: bf16[128,128], index: 5, kind: input, shape index: {}]
  %s6 = inlined_call_operand.vmem [shape: bf16[128,128], index: 6, kind: input, shape index: {}]
  %s7 = inlined_call_operand.vmem [shape: f32[1,128], index: 7, kind: input, shape index: {}]
  %s8 = inlined_call_operand.vmem [shape: bf16[12,4], index: 8, kind: input, shape index: {}]
  %s9 = inlined_call_operand.vmem [shape: bf16[12,4], index: 9, kind: input, shape index: {}]
  %s10 = inlined_call_operand.vmem [shape: f32[1,128], index: 10, kind: output, shape index: {}]
  %s11 = sld [smem:[#allocation0]]
  $region81: #{model_forward.1} parent=0
    _
  %s13 = ssub.s32 1, %s11
  %s14 = scalar_select 0, %s13, %s11
  $region1: #{model_forward.1} parent=0
    #allocation5 [shape = 'u8[4096]{0}', space=vmem, size = 0x1000, scoped, tag = 'input window, operand 2, single buffered']
    #allocation6 [shape = 's32[2]{0}', space=sflag, size = 0x8, scoped, tag = 'scoped memory for model_forward.1']
    %15 = vsyncpa [#allocation6], 0
    loop: start=0, step=1, limit=4
    $region2: #{model_forward.1} parent=1 // loop_pre_header
      _
    $region3: #{model_forward.1} parent=1 // loop_header
      %s17 = sphi 0, %s21
      %p18 = scmp.ge.s32.totalorder %s17, 4
      %s27 = sphi 0, %s29
      %s30 = sphi 0, %s27
      %s31 = sphi 0, %s30
      %s47 = sphi 0, %s31
      %s53 = sphi 0, %s55
      %s56 = sphi 0, %s53
      %s57 = sphi 0, %s56
      %s73 = sphi 0, %s57
      %s77 = sphi 0, %s77
      %s79 = sphi 0, %s77
      %s80 = sphi 0, %s79
      %s94 = sphi 0, %s80
      %s98 = sphi 0, %s98
      %s100 = sphi 0, %s98
      %s101 = sphi 0, %s100
      %s115 = sphi 0, %s101
      %s119 = sphi 0, %s119
      %s121 = sphi 0, %s119
      %s122 = sphi 0, %s121
      %s136 = sphi 0, %s122
      %s140 = sphi 0, %s140
      %s142 = sphi 0, %s140
      %s143 = sphi 0, %s142
      %s157 = sphi 0, %s143
      %s161 = sphi 0, %s161
      %s163 = sphi 0, %s161
      %s164 = sphi 0, %s163
      %s178 = sphi 0, %s164
      %s182 = sphi 0, %s182
      %s184 = sphi 0, %s182
      %s185 = sphi 0, %s184
      %s199 = sphi 0, %s185
      %s203 = sphi 0, %s203
      %s205 = sphi 0, %s203
      %s206 = sphi 0, %s205
      %s220 = sphi 0, %s206
      %s224 = sphi 0, %s224
      %s226 = sphi 0, %s224
      %s227 = sphi 0, %s226
      %s241 = sphi 0, %s227
      %s245 = sphi 0, %s245
      %s247 = sphi 0, %s245
      %s248 = sphi 0, %s247
      %s262 = sphi 0, %s248
    $region4: #{model_forward.1} parent=1 // loop_header_branch
      %20 = sbr.rel (%p18) target = $region8
    $region5: #{model_forward.1} parent=1 // loop_body
      %s22 = ssub.s32 %s17, 1
      %s23 = ssub.s32 %s17, 2
      %s24 = sadd.s32 %s17, 1
      %s25 = ssub.s32 %s17, %s24
      %p26 = scmp.eq.s32.totalorder %s25, 0
      %s28 = sadd.s32 %s27, 1
      %s29 = scalar_select %p26, %s27, %s28
      %p32 = pneg %p26
      %p33 = scmp.eq.s32.totalorder %s17, 1
      %p34 = por %p32, %p33
      %p35 = scmp.ne.s32.totalorder %s27, %s30
      %p36 = scmp.eq.s32.totalorder %s17, 0
      %p37 = por %p35, %p36
      %p38 = scmp.ne.s32.totalorder %s27, %s30
      %p39 = scmp.eq.s32.totalorder %s22, 1
      %p40 = por %p38, %p39
      %p41 = scmp.ne.s32.totalorder %s30, %s31
      %p42 = scmp.eq.s32.totalorder %s22, 0
      %p43 = por %p41, %p42
      %p44 = scmp.ne.s32.totalorder %s30, %s31
      %p45 = scmp.eq.s32.totalorder %s23, 1
      %p46 = por %p44, %p45
      %p48 = scmp.ne.s32.totalorder %s31, %s47
      %p49 = scmp.eq.s32.totalorder %s23, 0
      %p50 = por %p48, %p49
      %s51 = ssub.s32 %s17, %s24
      %p52 = scmp.eq.s32.totalorder %s51, 0
      %s54 = sadd.s32 %s53, 1
      %s55 = scalar_select %p52, %s53, %s54
      %p58 = pneg %p52
      %p59 = scmp.eq.s32.totalorder %s17, 1
      %p60 = por %p58, %p59
      %p61 = scmp.ne.s32.totalorder %s53, %s56
      %p62 = scmp.eq.s32.totalorder %s17, 0
      %p63 = por %p61, %p62
      %p64 = scmp.ne.s32.totalorder %s53, %s56
      %p65 = scmp.eq.s32.totalorder %s22, 1
      %p66 = por %p64, %p65
      %p67 = scmp.ne.s32.totalorder %s56, %s57
      %p68 = scmp.eq.s32.totalorder %s22, 0
      %p69 = por %p67, %p68
      %p70 = scmp.ne.s32.totalorder %s56, %s57
      %p71 = scmp.eq.s32.totalorder %s23, 1
      %p72 = por %p70, %p71
      %p74 = scmp.ne.s32.totalorder %s57, %s73
      %p75 = scmp.eq.s32.totalorder %s23, 0
      %p76 = por %p74, %p75
      %s78 = sadd.s32 %s77, 1
      %p81 = scmp.eq.s32.totalorder %s17, 1
      %p82 = scmp.ne.s32.totalorder %s77, %s79
      %p83 = scmp.eq.s32.totalorder %s17, 0
      %p84 = por %p82, %p83
      %p85 = scmp.ne.s32.totalorder %s77, %s79
      %p86 = scmp.eq.s32.totalorder %s22, 1
      %p87 = por %p85, %p86
      %p88 = scmp.ne.s32.totalorder %s79, %s80
      %p89 = scmp.eq.s32.totalorder %s22, 0
      %p90 = por %p88, %p89
      %p91 = scmp.ne.s32.totalorder %s79, %s80
      %p92 = scmp.eq.s32.totalorder %s23, 1
      %p93 = por %p91, %p92
      %p95 = scmp.ne.s32.totalorder %s80, %s94
      %p96 = scmp.eq.s32.totalorder %s23, 0
      %p97 = por %p95, %p96
      %s99 = sadd.s32 %s98, 1
      %p102 = scmp.eq.s32.totalorder %s17, 1
      %p103 = scmp.ne.s32.totalorder %s98, %s100
      %p104 = scmp.eq.s32.totalorder %s17, 0
      %p105 = por %p103, %p104
      %p106 = scmp.ne.s32.totalorder %s98, %s100
      %p107 = scmp.eq.s32.totalorder %s22, 1
      %p108 = por %p106, %p107
      %p109 = scmp.ne.s32.totalorder %s100, %s101
      %p110 = scmp.eq.s32.totalorder %s22, 0
      %p111 = por %p109, %p110
      %p112 = scmp.ne.s32.totalorder %s100, %s101
      %p113 = scmp.eq.s32.totalorder %s23, 1
      %p114 = por %p112, %p113
      %p116 = scmp.ne.s32.totalorder %s101, %s115
      %p117 = scmp.eq.s32.totalorder %s23, 0
      %p118 = por %p116, %p117
      %s120 = sadd.s32 %s119, 1
      %p123 = scmp.eq.s32.totalorder %s17, 1
      %p124 = scmp.ne.s32.totalorder %s119, %s121
      %p125 = scmp.eq.s32.totalorder %s17, 0
      %p126 = por %p124, %p125
      %p127 = scmp.ne.s32.totalorder %s119, %s121
      %p128 = scmp.eq.s32.totalorder %s22, 1
      %p129 = por %p127, %p128
      %p130 = scmp.ne.s32.totalorder %s121, %s122
      %p131 = scmp.eq.s32.totalorder %s22, 0
      %p132 = por %p130, %p131
      %p133 = scmp.ne.s32.totalorder %s121, %s122
      %p134 = scmp.eq.s32.totalorder %s23, 1
      %p135 = por %p133, %p134
      %p137 = scmp.ne.s32.totalorder %s122, %s136
      %p138 = scmp.eq.s32.totalorder %s23, 0
      %p139 = por %p137, %p138
      %s141 = sadd.s32 %s140, 1
      %p144 = scmp.eq.s32.totalorder %s17, 1
      %p145 = scmp.ne.s32.totalorder %s140, %s142
      %p146 = scmp.eq.s32.totalorder %s17, 0
      %p147 = por %p145, %p146
      %p148 = scmp.ne.s32.totalorder %s140, %s142
      %p149 = scmp.eq.s32.totalorder %s22, 1
      %p150 = por %p148, %p149
      %p151 = scmp.ne.s32.totalorder %s142, %s143
      %p152 = scmp.eq.s32.totalorder %s22, 0
      %p153 = por %p151, %p152
      %p154 = scmp.ne.s32.totalorder %s142, %s143
      %p155 = scmp.eq.s32.totalorder %s23, 1
      %p156 = por %p154, %p155
      %p158 = scmp.ne.s32.totalorder %s143, %s157
      %p159 = scmp.eq.s32.totalorder %s23, 0
      %p160 = por %p158, %p159
      %s162 = sadd.s32 %s161, 1
      %p165 = scmp.eq.s32.totalorder %s17, 1
      %p166 = scmp.ne.s32.totalorder %s161, %s163
      %p167 = scmp.eq.s32.totalorder %s17, 0
      %p168 = por %p166, %p167
      %p169 = scmp.ne.s32.totalorder %s161, %s163
      %p170 = scmp.eq.s32.totalorder %s22, 1
      %p171 = por %p169, %p170
      %p172 = scmp.ne.s32.totalorder %s163, %s164
      %p173 = scmp.eq.s32.totalorder %s22, 0
      %p174 = por %p172, %p173
      %p175 = scmp.ne.s32.totalorder %s163, %s164
      %p176 = scmp.eq.s32.totalorder %s23, 1
      %p177 = por %p175, %p176
      %p179 = scmp.ne.s32.totalorder %s164, %s178
      %p180 = scmp.eq.s32.totalorder %s23, 0
      %p181 = por %p179, %p180
      %s183 = sadd.s32 %s182, 1
      %p186 = scmp.eq.s32.totalorder %s17, 1
      %p187 = scmp.ne.s32.totalorder %s182, %s184
      %p188 = scmp.eq.s32.totalorder %s17, 0
      %p189 = por %p187, %p188
      %p190 = scmp.ne.s32.totalorder %s182, %s184
      %p191 = scmp.eq.s32.totalorder %s22, 1
      %p192 = por %p190, %p191
      %p193 = scmp.ne.s32.totalorder %s184, %s185
      %p194 = scmp.eq.s32.totalorder %s22, 0
      %p195 = por %p193, %p194
      %p196 = scmp.ne.s32.totalorder %s184, %s185
      %p197 = scmp.eq.s32.totalorder %s23, 1
      %p198 = por %p196, %p197
      %p200 = scmp.ne.s32.totalorder %s185, %s199
      %p201 = scmp.eq.s32.totalorder %s23, 0
      %p202 = por %p200, %p201
      %s204 = sadd.s32 %s203, 1
      %p207 = scmp.eq.s32.totalorder %s17, 1
      %p208 = scmp.ne.s32.totalorder %s203, %s205
      %p209 = scmp.eq.s32.totalorder %s17, 0
      %p210 = por %p208, %p209
      %p211 = scmp.ne.s32.totalorder %s203, %s205
      %p212 = scmp.eq.s32.totalorder %s22, 1
      %p213 = por %p211, %p212
      %p214 = scmp.ne.s32.totalorder %s205, %s206
      %p215 = scmp.eq.s32.totalorder %s22, 0
      %p216 = por %p214, %p215
      %p217 = scmp.ne.s32.totalorder %s205, %s206
      %p218 = scmp.eq.s32.totalorder %s23, 1
      %p219 = por %p217, %p218
      %p221 = scmp.ne.s32.totalorder %s206, %s220
      %p222 = scmp.eq.s32.totalorder %s23, 0
      %p223 = por %p221, %p222
      %s225 = sadd.s32 %s224, 1
      %p228 = scmp.eq.s32.totalorder %s17, 1
      %p229 = scmp.ne.s32.totalorder %s224, %s226
      %p230 = scmp.eq.s32.totalorder %s17, 0
      %p231 = por %p229, %p230
      %p232 = scmp.ne.s32.totalorder %s224, %s226
      %p233 = scmp.eq.s32.totalorder %s22, 1
      %p234 = por %p232, %p233
      %p235 = scmp.ne.s32.totalorder %s226, %s227
      %p236 = scmp.eq.s32.totalorder %s22, 0
      %p237 = por %p235, %p236
      %p238 = scmp.ne.s32.totalorder %s226, %s227
      %p239 = scmp.eq.s32.totalorder %s23, 1
      %p240 = por %p238, %p239
      %p242 = scmp.ne.s32.totalorder %s227, %s241
      %p243 = scmp.eq.s32.totalorder %s23, 0
      %p244 = por %p242, %p243
      %s246 = sadd.s32 %s245, 1
      %p249 = scmp.eq.s32.totalorder %s17, 1
      %p250 = scmp.ne.s32.totalorder %s245, %s247
      %p251 = scmp.eq.s32.totalorder %s17, 0
      %p252 = por %p250, %p251
      %p253 = scmp.ne.s32.totalorder %s245, %s247
      %p254 = scmp.eq.s32.totalorder %s22, 1
      %p255 = por %p253, %p254
      %p256 = scmp.ne.s32.totalorder %s247, %s248
      %p257 = scmp.eq.s32.totalorder %s22, 0
      %p258 = por %p256, %p257
      %p259 = scmp.ne.s32.totalorder %s247, %s248
      %p260 = scmp.eq.s32.totalorder %s23, 1
      %p261 = por %p259, %p260
      %p263 = scmp.ne.s32.totalorder %s248, %s262
      %p264 = scmp.eq.s32.totalorder %s23, 0
      %p265 = por %p263, %p264
      %p266 = scmp.le.s32.totalorder 1, %s17
      %p267 = scmp.lt.s32.totalorder %s17, 3
      %p268 = pnand %p266, %p267
      %p269 = pneg %p268
      // Predicated region
      $region9: #{model_forward.1} parent=5 // pred_check
        _
      $region10: #{model_forward.1} parent=5 // pred_check_branch
        %271 = sbr.rel (%p268) target = $region12
      $region11: #{model_forward.1} parent=5 // pred_region
        %s272 = ssub.s32 %s17, 1
        // Predicated region
        $region13: #{model_forward.1} parent=11 // pred_check
          %p273 = pneg %p90
        $region14: #{model_forward.1} parent=11 // pred_check_branch
          %275 = sbr.rel (%p273) target = $region16
        $region15: #{model_forward.1} parent=11 // pred_region
          %s277 = ssub.s32 128, 128
          %278 = vsyncadd [#allocation6], %s277
          %s279 = sshll.u32 [#allocation5], 4
          %s280 = int_to_ptr.vmem [resolvable:$true] %s279
          %285 = dma.hbm_to_vmem [thread:$0]  %s2, 128, %s280, [#allocation6], 64, 64, 4
        $region16: #{model_forward.1} parent=11 // pred_fallthru
          _
        // Predicated region
        $region17: #{model_forward.1} parent=11 // pred_check
          %p286 = pneg %p111
        $region18: #{model_forward.1} parent=11 // pred_check_branch
          %288 = sbr.rel (%p286) target = $region20
        $region19: #{model_forward.1} parent=11 // pred_region
          _
        $region20: #{model_forward.1} parent=11 // pred_fallthru
          _
        // Predicated region
        $region21: #{model_forward.1} parent=11 // pred_check
          %p289 = pneg %p132
        $region22: #{model_forward.1} parent=11 // pred_check_branch
          %291 = sbr.rel (%p289) target = $region24
        $region23: #{model_forward.1} parent=11 // pred_region
          _
        $region24: #{model_forward.1} parent=11 // pred_fallthru
          _
        // Predicated region
        $region25: #{model_forward.1} parent=11 // pred_check
          %p292 = pneg %p153
        $region26: #{model_forward.1} parent=11 // pred_check_branch
          %294 = sbr.rel (%p292) target = $region28
        $region27: #{model_forward.1} parent=11 // pred_region
          _
        $region28: #{model_forward.1} parent=11 // pred_fallthru
          _
        // Predicated region
        $region29: #{model_forward.1} parent=11 // pred_check
          %p295 = pneg %p174
        $region30: #{model_forward.1} parent=11 // pred_check_branch
          %297 = sbr.rel (%p295) target = $region32
        $region31: #{model_forward.1} parent=11 // pred_region
          _
        $region32: #{model_forward.1} parent=11 // pred_fallthru
          _
        // Predicated region
        $region33: #{model_forward.1} parent=11 // pred_check
          %p298 = pneg %p195
        $region34: #{model_forward.1} parent=11 // pred_check_branch
          %300 = sbr.rel (%p298) target = $region36
        $region35: #{model_forward.1} parent=11 // pred_region
          _
        $region36: #{model_forward.1} parent=11 // pred_fallthru
          _
        // Predicated region
        $region37: #{model_forward.1} parent=11 // pred_check
          %p301 = pneg %p216
        $region38: #{model_forward.1} parent=11 // pred_check_branch
          %303 = sbr.rel (%p301) target = $region40
        $region39: #{model_forward.1} parent=11 // pred_region
          _
        $region40: #{model_forward.1} parent=11 // pred_fallthru
          _
        // Predicated region
        $region41: #{model_forward.1} parent=11 // pred_check
          %p304 = pneg %p237
        $region42: #{model_forward.1} parent=11 // pred_check_branch
          %306 = sbr.rel (%p304) target = $region44
        $region43: #{model_forward.1} parent=11 // pred_region
          _
        $region44: #{model_forward.1} parent=11 // pred_fallthru
          _
      $region12: #{model_forward.1} parent=5 // pred_fallthru
        _
      %p307 = scmp.lt.s32.totalorder %s17, 2
      // Predicated region
      $region45: #{model_forward.1} parent=5 // pred_check
        %p308 = pneg %p307
      $region46: #{model_forward.1} parent=5 // pred_check_branch
        %310 = sbr.rel (%p308) target = $region48
      $region47: #{model_forward.1} parent=5 // pred_region
        // Predicated region
        $region49: #{model_forward.1} parent=47 // pred_check
          %p311 = pneg %p37
        $region50: #{model_forward.1} parent=47 // pred_check_branch
          %313 = sbr.rel (%p311) target = $region52
        $region51: #{model_forward.1} parent=47 // pred_region
          %s314 = smul.u32 2, %s17
          %p315 = scmp.lt.s32.totalorder %s314, 3
          %s316 = scalar_select %p315, %s314, 3
          %s317 = smul.addr %s316, 4
          %s318 = scalar_lea.vmem %s0, %s317
          %s319 = smul.u32 2, %s17
        $region52: #{model_forward.1} parent=47 // pred_fallthru
          _
        // Predicated region
        $region53: #{model_forward.1} parent=47 // pred_check
          %p320 = pneg %p63
        $region54: #{model_forward.1} parent=47 // pred_check_branch
          %322 = sbr.rel (%p320) target = $region56
        $region55: #{model_forward.1} parent=47 // pred_region
          %s323 = smul.u32 2, %s17
          %p324 = scmp.lt.s32.totalorder %s323, 3
          %s325 = scalar_select %p324, %s323, 3
          %s326 = smul.addr %s325, 4
          %s327 = scalar_lea.vmem %s1, %s326
          %s328 = smul.u32 2, %s17
        $region56: #{model_forward.1} parent=47 // pred_fallthru
          _
      $region48: #{model_forward.1} parent=5 // pred_fallthru
        _
      %p329 = scmp.le.s32.totalorder 1, %s17
      %p330 = scmp.lt.s32.totalorder %s17, 3
      %p331 = pnand %p329, %p330
      %p332 = pneg %p331
      // Predicated region
      $region57: #{model_forward.1} parent=5 // pred_check
        _
      $region58: #{model_forward.1} parent=5 // pred_check_branch
        %334 = sbr.rel (%p331) target = $region60
      $region59: #{model_forward.1} parent=5 // pred_region
        %s335 = ssub.s32 %s17, 1
        // Predicated region
        $region61: #{model_forward.1} parent=59 // pred_check
          %p336 = pneg %p90
        $region62: #{model_forward.1} parent=59 // pred_check_branch
          %338 = sbr.rel (%p336) target = $region64
        $region63: #{model_forward.1} parent=59 // pred_region
          %339 = dma.done [#allocation6], 128
        $region64: #{model_forward.1} parent=59 // pred_fallthru
          _
        %s340 = smul.u32 2, %s22
        %p341 = scmp.lt.s32.totalorder %s340, 3
        %s342 = scalar_select %p341, %s340, 3
        %s343 = smul.addr %s342, 4
        %s344 = scalar_lea.vmem %s0, %s343
        %p345 = pneg %p43
        %p346 = pneg %p40
        %s347 = smul.u32 2, %s22
        %p348 = scmp.lt.s32.totalorder %s347, 3
        %s349 = scalar_select %p348, %s347, 3
        %s350 = smul.addr %s349, 4
        %s351 = scalar_lea.vmem %s1, %s350
        %p352 = pneg %p69
        %p353 = pneg %p66
        %p354 = pneg %p90
        %p355 = pneg %p87
        %p356 = pneg %p111
        %p357 = pneg %p108
        %p358 = pneg %p132
        %p359 = pneg %p129
        %p360 = pneg %p153
        %p361 = pneg %p150
        %p362 = pneg %p174
        %p363 = pneg %p171
        %p364 = pneg %p195
        %p365 = pneg %p192
        %p366 = pneg %p216
        %p367 = pneg %p213
        %p368 = pneg %p237
        %p369 = pneg %p234
        %p370 = pneg %p258
        %p371 = pneg %p255
        %s372 = smul.u32 2, %s22
        %p373 = scmp.lt.s32.totalorder %s372, 3
        %s374 = scalar_select %p373, %s372, 3
        %s375 = smul.addr %s374, 4
        %s376 = scalar_lea.vmem %s0, %s375
        %s377 = smul.u32 2, %s22
        %s378 = smul.u32 2, %s22
        %p379 = scmp.lt.s32.totalorder %s378, 3
        %s380 = scalar_select %p379, %s378, 3
        %s381 = smul.addr %s380, 4
        %s382 = scalar_lea.vmem %s1, %s381
        %s383 = smul.u32 2, %s22
        %v385 = vld [vmem:[%s376] sm:$0xf]
        %v386 = vld [vmem:[%s376 + $0x4] sm:$0xf]
        %v387 = vld [vmem:[#allocation5] sm:$0xf]
        %v388 = vld [vmem:[#allocation5 + $0x4] sm:$0xf]
        %v391 = vunpack.c.l.b16 %v385
        %v392 = vunpack.c.l.b16 %v386
        %v393 = vpack.c.b16 %v392, %v391
        %v396 = vunpack.c.l.b16 %v387
        %v397 = vunpack.c.l.b16 %v388
        %v398 = vpack.c.b16 %v397, %v396
        %vm400 = vcmask 130048
        %v402 = vsel %vm400, %v393, 0
        %404 = vmatprep.subr.bf16.mxu0 0
        %405 = vmatpush1.bf16.msra.mxu0 %v398
        %406 = vmatprep.subr.bf16.mxu0 0
        %407 = vmatpush1.bf16.msra.mxu0 0
        %408 = vmatprep.subr.bf16.mxu0 0
        %409 = vmatpush1.bf16.msra.mxu0 0
        %410 = vmatprep.subr.bf16.mxu0 0
        %411 = vmatpush1.bf16.msra.mxu0 0
        %412 = vmatprep.subr.bf16.mxu0 0
        %413 = vmatpush1.bf16.msra.mxu0 0
        %414 = vmatprep.subr.bf16.mxu0 0
        %415 = vmatpush1.bf16.msra.mxu0 0
        %416 = vmatprep.subr.bf16.mxu0 0
        %417 = vmatpush1.bf16.msra.mxu0 0
        %418 = vmatprep.subr.bf16.mxu0 0
        %419 = vmatpush1.bf16.msra.mxu0 0
        %420 = vmatprep.subr.bf16.mxu0 0
        %421 = vmatpush1.bf16.msra.mxu0 0
        %422 = vmatprep.subr.bf16.mxu0 0
        %423 = vmatpush1.bf16.msra.mxu0 0
        %424 = vmatprep.subr.bf16.mxu0 0
        %425 = vmatpush1.bf16.msra.mxu0 0
        %426 = vmatprep.subr.bf16.mxu0 0
        %427 = vmatpush1.bf16.msra.mxu0 0
        %428 = vmatprep.subr.bf16.mxu0 0
        %429 = vmatpush1.bf16.msra.mxu0 0
        %430 = vmatprep.subr.bf16.mxu0 0
        %431 = vmatpush1.bf16.msra.mxu0 0
        %432 = vmatprep.subr.bf16.mxu0 0
        %433 = vmatpush1.bf16.msra.mxu0 0
        %434 = vmatprep.subr.bf16.mxu0 0
        %435 = vmatpush1.bf16.msra.mxu0 0
        %436 = vmatprep.mubr.bf16.mxu0 0
        %437 = vmatmul.mubr.bf16.gmra.mrb[0].mxu0 %v402
        %v438 = vpop.f32.mrb[0].mxu0
        %v439 = vadd.f32 0.0, %v438
        %v440 = vpop.f32.mrb[0].mxu0
        %v441 = vpop.f32.mrb[0].mxu0
        %v442 = vadd.f32 0.0, %v441
        %v443 = vpop.f32.mrb[0].mxu0
        %444 = vdwg.mxu0
        %v445 = vpack.c.bf16 %v439, %v439
        %v446 = vpack.c.bf16 %v442, %v442
        %v447 = vld [vmem:[%s382] sm:$0xf]
        %v448 = vld [vmem:[%s382 + $0x4] sm:$0xf]
        %v449 = vld [vmem:[%s3] sm:$0x1]
        %v451 = vlaneseq
        %v452 = vshrl.u32 %v451, 7
        %v453 = vsub.s32 0, %v452
        %v454 = vrot.slane %v449, %v453
        %vm456 = vcmask 64512
        %v458 = vsel %vm456, %v447, 0
        %vm460 = vcmask 1043456
        %v462 = vsel %vm460, %v445, 0
        %464 = vmatprep.subr.bf16.mxu0 0
        %465 = vmatpush1.bf16.msra.mxu0 %v462
        %466 = vmatprep.subr.bf16.mxu0 0
        %467 = vmatpush1.bf16.msra.mxu0 0
        %468 = vmatprep.subr.bf16.mxu0 0
        %469 = vmatpush1.bf16.msra.mxu0 0
        %470 = vmatprep.subr.bf16.mxu0 0
        %471 = vmatpush1.bf16.msra.mxu0 0
        %472 = vmatprep.subr.bf16.mxu0 0
        %473 = vmatpush1.bf16.msra.mxu0 0
        %474 = vmatprep.subr.bf16.mxu0 0
        %475 = vmatpush1.bf16.msra.mxu0 0
        %476 = vmatprep.subr.bf16.mxu0 0
        %477 = vmatpush1.bf16.msra.mxu0 0
        %478 = vmatprep.subr.bf16.mxu0 0
        %479 = vmatpush1.bf16.msra.mxu0 0
        %480 = vmatprep.subr.bf16.mxu0 0
        %481 = vmatpush1.bf16.msra.mxu0 0
        %482 = vmatprep.subr.bf16.mxu0 0
        %483 = vmatpush1.bf16.msra.mxu0 0
        %484 = vmatprep.subr.bf16.mxu0 0
        %485 = vmatpush1.bf16.msra.mxu0 0
        %486 = vmatprep.subr.bf16.mxu0 0
        %487 = vmatpush1.bf16.msra.mxu0 0
        %488 = vmatprep.subr.bf16.mxu0 0
        %489 = vmatpush1.bf16.msra.mxu0 0
        %490 = vmatprep.subr.bf16.mxu0 0
        %491 = vmatpush1.bf16.msra.mxu0 0
        %492 = vmatprep.subr.bf16.mxu0 0
        %493 = vmatpush1.bf16.msra.mxu0 0
        %494 = vmatprep.subr.bf16.mxu0 0
        %495 = vmatpush1.bf16.msra.mxu0 0
        %496 = vmatprep.mubr.bf16.mxu0 0
        %497 = vmatmul.mubr.bf16.gmra.mrb[0].mxu0 %v458
        %v498 = vpop.f32.mrb[0].mxu0
        %v499 = vadd.f32 %v454, %v498
        %v500 = vpop.f32.mrb[0].mxu0
        %v501 = vpop.f32.mrb[0].mxu0
        %v502 = vpop.f32.mrb[0].mxu0
        %503 = vdwg.mxu0
        %v505 = vsel %vm456, %v448, 0
        %v508 = vsel %vm460, %v446, 0
        %510 = vmatprep.subr.bf16.mxu0 0
        %511 = vmatpush1.bf16.msra.mxu0 %v508
        %512 = vmatprep.subr.bf16.mxu0 0
        %513 = vmatpush1.bf16.msra.mxu0 0
        %514 = vmatprep.subr.bf16.mxu0 0
        %515 = vmatpush1.bf16.msra.mxu0 0
        %516 = vmatprep.subr.bf16.mxu0 0
        %517 = vmatpush1.bf16.msra.mxu0 0
        %518 = vmatprep.subr.bf16.mxu0 0
        %519 = vmatpush1.bf16.msra.mxu0 0
        %520 = vmatprep.subr.bf16.mxu0 0
        %521 = vmatpush1.bf16.msra.mxu0 0
        %522 = vmatprep.subr.bf16.mxu0 0
        %523 = vmatpush1.bf16.msra.mxu0 0
        %524 = vmatprep.subr.bf16.mxu0 0
        %525 = vmatpush1.bf16.msra.mxu0 0
        %526 = vmatprep.subr.bf16.mxu0 0
        %527 = vmatpush1.bf16.msra.mxu0 0
        %528 = vmatprep.subr.bf16.mxu0 0
        %529 = vmatpush1.bf16.msra.mxu0 0
        %530 = vmatprep.subr.bf16.mxu0 0
        %531 = vmatpush1.bf16.msra.mxu0 0
        %532 = vmatprep.subr.bf16.mxu0 0
        %533 = vmatpush1.bf16.msra.mxu0 0
        %534 = vmatprep.subr.bf16.mxu0 0
        %535 = vmatpush1.bf16.msra.mxu0 0
        %536 = vmatprep.subr.bf16.mxu0 0
        %537 = vmatpush1.bf16.msra.mxu0 0
        %538 = vmatprep.subr.bf16.mxu0 0
        %539 = vmatpush1.bf16.msra.mxu0 0
        %540 = vmatprep.subr.bf16.mxu0 0
        %541 = vmatpush1.bf16.msra.mxu0 0
        %542 = vmatprep.mubr.bf16.mxu0 0
        %543 = vmatmul.mubr.bf16.gmra.mrb[0].mxu0 %v505
        %v544 = vpop.f32.mrb[0].mxu0
        %v545 = vadd.f32 %v454, %v544
        %v546 = vpop.f32.mrb[0].mxu0
        %v547 = vpop.f32.mrb[0].mxu0
        %v548 = vpop.f32.mrb[0].mxu0
        %549 = vdwg.mxu0
        %vm550 = vcmp.gt.f32.partialorder %v499, 0.0
        %vm551 = vcmp.gt.f32.partialorder %v545, 0.0
        %v552 = vld [vmem:[%s4] sm:$0x1]
        %v554 = vlaneseq
        %v555 = vshrl.u32 %v554, 7
        %v556 = vsub.s32 0, %v555
        %v557 = vrot.slane %v552, %v556
        %v559 = vmul.f32 %v557, %v499
        %v560 = vmul.f32 %v557, %v545
        %v561 = vsel %vm550, %v499, %v559
        %v562 = vsel %vm551, %v545, %v560
        %v563 = vrot.slane %v561, 4
        %v564 = vadd.f32 %v561, %v563
        %v565 = vrot.slane %v564, 2
        %v566 = vadd.f32 %v564, %v565
        %v567 = vrot.slane %v566, 1
        %v568 = vadd.f32 %v566, %v567
        %v569 = vrot.slane %v562, 4
        %v570 = vadd.f32 %v562, %v569
        %v571 = vrot.slane %v570, 2
        %v572 = vadd.f32 %v570, %v571
        %v573 = vrot.slane %v572, 1
        %v574 = vadd.f32 %v572, %v573
        %v575 = vsub.f32 %v568, %v561
        %v576 = vsub.f32 %v574, %v562
        %v577 = vmul.f32 %v575, 0.14285715
        %v578 = vmul.f32 %v576, 0.14285715
        %s579 = smul.u32 %s22, 2
        %v582 = vrot.slane %v562, 7
        %s585 = scalar_lea.vmem [#allocation2], %s579
        %586 = vst [vmem:[%s585 - $0x7] sm:$0x80] %v561
        %587 = vst [vmem:[%s585 + $0x1] sm:$0x1] %v582
        %vm588 = vcmask 1047559
        %v589 = vsel %vm588, %v582, %v561
        %s591 = scalar_lea.vmem [#allocation3], %s579
        %592 = vst [vmem:[%s591 - $0x6] sm:$0xc0] %v589
        %v595 = vrot.slane %v578, 7
        %s598 = scalar_lea.vmem [#allocation4], %s579
        %599 = vst [vmem:[%s598 - $0x7] sm:$0x80] %v577
        %600 = vst [vmem:[%s598 + $0x1] sm:$0x1] %v595
        %p601 = scmp.eq.s32.totalorder %s22, 1
        // Predicated region
        $region65: #{model_forward.1} parent=59 // pred_check
          %p602 = pneg %p601
        $region66: #{model_forward.1} parent=59 // pred_check_branch
          %604 = sbr.rel (%p602) target = $region68
        $region67: #{model_forward.1} parent=59 // pred_region
          %v605 = vld [vmem:[#allocation2] sm:$0xf]
          %v606 = vpack.c.bf16 %v605, %v605
          %v607 = vld [vmem:[%s5] sm:$0xf]
          %v608 = vld [vmem:[%s5 + $0x4] sm:$0xf]
          %v609 = vld [vmem:[%s5 + $0x8] sm:$0xf]
          %v610 = vld [vmem:[%s5 + $0xc] sm:$0xf]
          %v611 = vld [vmem:[%s5 + $0x10] sm:$0xf]
          %v612 = vld [vmem:[%s5 + $0x14] sm:$0xf]
          %v613 = vld [vmem:[%s5 + $0x18] sm:$0xf]
          %v614 = vld [vmem:[%s5 + $0x1c] sm:$0xf]
          %v615 = vld [vmem:[%s5 + $0x20] sm:$0xf]
          %v616 = vld [vmem:[%s5 + $0x24] sm:$0xf]
          %v617 = vld [vmem:[%s5 + $0x28] sm:$0xf]
          %v618 = vld [vmem:[%s5 + $0x2c] sm:$0xf]
          %v619 = vld [vmem:[%s5 + $0x30] sm:$0xf]
          %v620 = vld [vmem:[%s5 + $0x34] sm:$0xf]
          %v621 = vld [vmem:[%s5 + $0x38] sm:$0xf]
          %v622 = vld [vmem:[%s5 + $0x3c] sm:$0xf]
          %v639 = vunpack.c.l.b16 %v607
          %v640 = vunpack.c.l.b16 %v608
          %v641 = vunpack.c.l.b16 %v609
          %v642 = vunpack.c.l.b16 %v610
          %v643 = vunpack.c.l.b16 %v611
          %v644 = vunpack.c.l.b16 %v612
          %v645 = vunpack.c.l.b16 %v613
          %v646 = vunpack.c.l.b16 %v614
          %v647 = vunpack.c.l.b16 %v615
          %v648 = vunpack.c.l.b16 %v616
          %v649 = vunpack.c.l.b16 %v617
          %v650 = vunpack.c.l.b16 %v618
          %v651 = vunpack.c.l.b16 %v619
          %v652 = vunpack.c.l.b16 %v620
          %v653 = vunpack.c.l.b16 %v621
          %v654 = vunpack.c.l.b16 %v622
          %v655 = vpack.c.b16 %v640, %v639
          %v656 = vpack.c.b16 %v642, %v641
          %v657 = vpack.c.b16 %v644, %v643
          %v658 = vpack.c.b16 %v646, %v645
          %v659 = vpack.c.b16 %v648, %v647
          %v660 = vpack.c.b16 %v650, %v649
          %v661 = vpack.c.b16 %v652, %v651
          %v662 = vpack.c.b16 %v654, %v653
          %671 = vmatprep.subr.bf16.mxu0 0
          %672 = vmatpush1.bf16.msra.mxu0 %v655
          %673 = vmatprep.subr.bf16.mxu0 0
          %674 = vmatpush1.bf16.msra.mxu0 %v656
          %675 = vmatprep.subr.bf16.mxu0 0
          %676 = vmatpush1.bf16.msra.mxu0 %v657
          %677 = vmatprep.subr.bf16.mxu0 0
          %678 = vmatpush1.bf16.msra.mxu0 %v658
          %679 = vmatprep.subr.bf16.mxu0 0
          %680 = vmatpush1.bf16.msra.mxu0 %v659
          %681 = vmatprep.subr.bf16.mxu0 0
          %682 = vmatpush1.bf16.msra.mxu0 %v660
          %683 = vmatprep.subr.bf16.mxu0 0
          %684 = vmatpush1.bf16.msra.mxu0 %v661
          %685 = vmatprep.subr.bf16.mxu0 0
          %686 = vmatpush1.bf16.msra.mxu0 %v662
          %687 = vmatprep.subr.bf16.mxu0 0
          %688 = vmatpush1.bf16.msra.mxu0 0
          %689 = vmatprep.subr.bf16.mxu0 0
          %690 = vmatpush1.bf16.msra.mxu0 0
          %691 = vmatprep.subr.bf16.mxu0 0
          %692 = vmatpush1.bf16.msra.mxu0 0
          %693 = vmatprep.subr.bf16.mxu0 0
          %694 = vmatpush1.bf16.msra.mxu0 0
          %695 = vmatprep.subr.bf16.mxu0 0
          %696 = vmatpush1.bf16.msra.mxu0 0
          %697 = vmatprep.subr.bf16.mxu0 0
          %698 = vmatpush1.bf16.msra.mxu0 0
          %699 = vmatprep.subr.bf16.mxu0 0
          %700 = vmatpush1.bf16.msra.mxu0 0
          %701 = vmatprep.subr.bf16.mxu0 0
          %702 = vmatpush1.bf16.msra.mxu0 0
          %703 = vmatprep.mubr.bf16.mxu0 0
          %704 = vmatmul.mubr.bf16.gmra.mrb[0].mxu0 %v606
          %v705 = vpop.f32.mrb[0].mxu0
          %v706 = vadd.f32 0.0, %v705
          %v707 = vpop.f32.mrb[0].mxu0
          %v708 = vpop.f32.mrb[0].mxu0
          %v709 = vpop.f32.mrb[0].mxu0
          %710 = vdwg.mxu0
          %v711 = vld [vmem:[%s6] sm:$0xf]
          %v712 = vld [vmem:[%s6 + $0x4] sm:$0xf]
          %v713 = vld [vmem:[%s6 + $0x8] sm:$0xf]
          %v714 = vld [vmem:[%s6 + $0xc] sm:$0xf]
          %v715 = vld [vmem:[%s6 + $0x10] sm:$0xf]
          %v716 = vld [vmem:[%s6 + $0x14] sm:$0xf]
          %v717 = vld [vmem:[%s6 + $0x18] sm:$0xf]
          %v718 = vld [vmem:[%s6 + $0x1c] sm:$0xf]
          %v719 = vld [vmem:[%s6 + $0x20] sm:$0xf]
          %v720 = vld [vmem:[%s6 + $0x24] sm:$0xf]
          %v721 = vld [vmem:[%s6 + $0x28] sm:$0xf]
          %v722 = vld [vmem:[%s6 + $0x2c] sm:$0xf]
          %v723 = vld [vmem:[%s6 + $0x30] sm:$0xf]
          %v724 = vld [vmem:[%s6 + $0x34] sm:$0xf]
          %v725 = vld [vmem:[%s6 + $0x38] sm:$0xf]
          %v726 = vld [vmem:[%s6 + $0x3c] sm:$0xf]
          %v743 = vunpack.c.l.b16 %v711
          %v744 = vunpack.c.l.b16 %v712
          %v745 = vunpack.c.l.b16 %v713
          %v746 = vunpack.c.l.b16 %v714
          %v747 = vunpack.c.l.b16 %v715
          %v748 = vunpack.c.l.b16 %v716
          %v749 = vunpack.c.l.b16 %v717
          %v750 = vunpack.c.l.b16 %v718
          %v751 = vunpack.c.l.b16 %v719
          %v752 = vunpack.c.l.b16 %v720
          %v753 = vunpack.c.l.b16 %v721
          %v754 = vunpack.c.l.b16 %v722
          %v755 = vunpack.c.l.b16 %v723
          %v756 = vunpack.c.l.b16 %v724
          %v757 = vunpack.c.l.b16 %v725
          %v758 = vunpack.c.l.b16 %v726
          %v759 = vpack.c.b16 %v744, %v743
          %v760 = vpack.c.b16 %v746, %v745
          %v761 = vpack.c.b16 %v748, %v747
          %v762 = vpack.c.b16 %v750, %v749
          %v763 = vpack.c.b16 %v752, %v751
          %v764 = vpack.c.b16 %v754, %v753
          %v765 = vpack.c.b16 %v756, %v755
          %v766 = vpack.c.b16 %v758, %v757
          %775 = vmatprep.subr.bf16.mxu0 0
          %776 = vmatpush1.bf16.msra.mxu0 %v759
          %777 = vmatprep.subr.bf16.mxu0 0
          %778 = vmatpush1.bf16.msra.mxu0 %v760
          %779 = vmatprep.subr.bf16.mxu0 0
          %780 = vmatpush1.bf16.msra.mxu0 %v761
          %781 = vmatprep.subr.bf16.mxu0 0
          %782 = vmatpush1.bf16.msra.mxu0 %v762
          %783 = vmatprep.subr.bf16.mxu0 0
          %784 = vmatpush1.bf16.msra.mxu0 %v763
          %785 = vmatprep.subr.bf16.mxu0 0
          %786 = vmatpush1.bf16.msra.mxu0 %v764
          %787 = vmatprep.subr.bf16.mxu0 0
          %788 = vmatpush1.bf16.msra.mxu0 %v765
          %789 = vmatprep.subr.bf16.mxu0 0
          %790 = vmatpush1.bf16.msra.mxu0 %v766
          %791 = vmatprep.subr.bf16.mxu0 0
          %792 = vmatpush1.bf16.msra.mxu0 0
          %793 = vmatprep.subr.bf16.mxu0 0
          %794 = vmatpush1.bf16.msra.mxu0 0
          %795 = vmatprep.subr.bf16.mxu0 0
          %796 = vmatpush1.bf16.msra.mxu0 0
          %797 = vmatprep.subr.bf16.mxu0 0
          %798 = vmatpush1.bf16.msra.mxu0 0
          %799 = vmatprep.subr.bf16.mxu0 0
          %800 = vmatpush1.bf16.msra.mxu0 0
          %801 = vmatprep.subr.bf16.mxu0 0
          %802 = vmatpush1.bf16.msra.mxu0 0
          %803 = vmatprep.subr.bf16.mxu0 0
          %804 = vmatpush1.bf16.msra.mxu0 0
          %805 = vmatprep.subr.bf16.mxu0 0
          %806 = vmatpush1.bf16.msra.mxu0 0
          %807 = vmatprep.mubr.bf16.mxu0 0
          %808 = vmatmul.mubr.bf16.gmra.mrb[0].mxu0 %v606
          %v809 = vpop.f32.mrb[0].mxu0
          %v810 = vadd.f32 0.0, %v809
          %v811 = vpop.f32.mrb[0].mxu0
          %v812 = vpop.f32.mrb[0].mxu0
          %v813 = vpop.f32.mrb[0].mxu0
          %814 = vdwg.mxu0
          %v815 = vld [vmem:[%s8] sm:$0xf]
          %v816 = vld [vmem:[%s8 + $0x4] sm:$0x3]
          %v817 = vld [vmem:[#allocation4] sm:$0xf]
          %v818 = vpack.c.bf16 %v817, %v817
          %v821 = vunpack.c.l.b16 %v815
          %v822 = vunpack.c.l.b16 %v816
          %v823 = vpack.c.b16 %v822, %v821
          %vm824 = vcmask 31744
          %v826 = vsel %vm824, %v823, 0
          %vm828 = vcmask 1041408
          %v830 = vsel %vm828, %v818, 0
          %832 = vmatprep.subr.bf16.mxu0 0
          %833 = vmatpush1.bf16.msra.mxu0 %v830
          %834 = vmatprep.subr.bf16.mxu0 0
          %835 = vmatpush1.bf16.msra.mxu0 0
          %836 = vmatprep.subr.bf16.mxu0 0
          %837 = vmatpush1.bf16.msra.mxu0 0
          %838 = vmatprep.subr.bf16.mxu0 0
          %839 = vmatpush1.bf16.msra.mxu0 0
          %840 = vmatprep.subr.bf16.mxu0 0
          %841 = vmatpush1.bf16.msra.mxu0 0
          %842 = vmatprep.subr.bf16.mxu0 0
          %843 = vmatpush1.bf16.msra.mxu0 0
          %844 = vmatprep.subr.bf16.mxu0 0
          %845 = vmatpush1.bf16.msra.mxu0 0
          %846 = vmatprep.subr.bf16.mxu0 0
          %847 = vmatpush1.bf16.msra.mxu0 0
          %848 = vmatprep.subr.bf16.mxu0 0
          %849 = vmatpush1.bf16.msra.mxu0 0
          %850 = vmatprep.subr.bf16.mxu0 0
          %851 = vmatpush1.bf16.msra.mxu0 0
          %852 = vmatprep.subr.bf16.mxu0 0
          %853 = vmatpush1.bf16.msra.mxu0 0
          %854 = vmatprep.subr.bf16.mxu0 0
          %855 = vmatpush1.bf16.msra.mxu0 0
          %856 = vmatprep.subr.bf16.mxu0 0
          %857 = vmatpush1.bf16.msra.mxu0 0
          %858 = vmatprep.subr.bf16.mxu0 0
          %859 = vmatpush1.bf16.msra.mxu0 0
          %860 = vmatprep.subr.bf16.mxu0 0
          %861 = vmatpush1.bf16.msra.mxu0 0
          %862 = vmatprep.subr.bf16.mxu0 0
          %863 = vmatpush1.bf16.msra.mxu0 0
          %864 = vmatprep.mubr.bf16.mxu0 0
          %865 = vmatmul.mubr.bf16.gmra.mrb[0].mxu0 %v826
          %v866 = vpop.f32.mrb[0].mxu0
          %v867 = vadd.f32 0.0, %v866
          %v868 = vpop.f32.mrb[0].mxu0
          %v869 = vpop.f32.mrb[0].mxu0
          %v870 = vadd.f32 0.0, %v869
          %v871 = vpop.f32.mrb[0].mxu0
          %872 = vdwg.mxu0
          %v873 = vld [vmem:[%s9] sm:$0xf]
          %v874 = vld [vmem:[%s9 + $0x4] sm:$0x3]
          %v875 = vld [vmem:[#allocation3] sm:$0xf]
          %v876 = vpack.c.bf16 %v875, %v875
          %v879 = vunpack.c.l.b16 %v873
          %v880 = vunpack.c.l.b16 %v874
          %v881 = vpack.c.b16 %v880, %v879
          %v883 = vsel %vm824, %v881, 0
          %v886 = vsel %vm828, %v876, 0
          %888 = vmatprep.subr.bf16.mxu0 0
          %889 = vmatpush1.bf16.msra.mxu0 %v886
          %890 = vmatprep.subr.bf16.mxu0 0
          %891 = vmatpush1.bf16.msra.mxu0 0
          %892 = vmatprep.subr.bf16.mxu0 0
          %893 = vmatpush1.bf16.msra.mxu0 0
          %894 = vmatprep.subr.bf16.mxu0 0
          %895 = vmatpush1.bf16.msra.mxu0 0
          %896 = vmatprep.subr.bf16.mxu0 0
          %897 = vmatpush1.bf16.msra.mxu0 0
          %898 = vmatprep.subr.bf16.mxu0 0
          %899 = vmatpush1.bf16.msra.mxu0 0
          %900 = vmatprep.subr.bf16.mxu0 0
          %901 = vmatpush1.bf16.msra.mxu0 0
          %902 = vmatprep.subr.bf16.mxu0 0
          %903 = vmatpush1.bf16.msra.mxu0 0
          %904 = vmatprep.subr.bf16.mxu0 0
          %905 = vmatpush1.bf16.msra.mxu0 0
          %906 = vmatprep.subr.bf16.mxu0 0
          %907 = vmatpush1.bf16.msra.mxu0 0
          %908 = vmatprep.subr.bf16.mxu0 0
          %909 = vmatpush1.bf16.msra.mxu0 0
          %910 = vmatprep.subr.bf16.mxu0 0
          %911 = vmatpush1.bf16.msra.mxu0 0
          %912 = vmatprep.subr.bf16.mxu0 0
          %913 = vmatpush1.bf16.msra.mxu0 0
          %914 = vmatprep.subr.bf16.mxu0 0
          %915 = vmatpush1.bf16.msra.mxu0 0
          %916 = vmatprep.subr.bf16.mxu0 0
          %917 = vmatpush1.bf16.msra.mxu0 0
          %918 = vmatprep.subr.bf16.mxu0 0
          %919 = vmatpush1.bf16.msra.mxu0 0
          %920 = vmatprep.mubr.bf16.mxu0 0
          %921 = vmatmul.mubr.bf16.gmra.mrb[0].mxu0 %v883
          %v922 = vpop.f32.mrb[0].mxu0
          %v923 = vadd.f32 0.0, %v922
          %v924 = vpop.f32.mrb[0].mxu0
          %v925 = vpop.f32.mrb[0].mxu0
          %v926 = vadd.f32 0.0, %v925
          %v927 = vpop.f32.mrb[0].mxu0
          %928 = vdwg.mxu0
          %v930 = vrot.slane %v706, 4
          %v932 = vsel %vm460, %v706, %v930
          %v934 = vrot.slane %v810, 4
          %v936 = vsel %vm460, %v810, %v934
          %v937 = vmul.f32 %v932, %v867
          %v938 = vmul.f32 %v706, %v870
          %v939 = vmul.f32 %v936, %v923
          %v940 = vmul.f32 %v810, %v926
          %v943 = vrot.slane %v939, 4
          %v944 = vrot.slane %v940, 4
          %v945 = vsel %vm460, %v943, %v944
          %v948 = vsel %vm460, %v938, %v943
          %949 = vmatprep.subr.mxu0 0.0
          %950 = vmatpush1.xpose.msra.mxu0 %v937
          %951 = vmatprep.subr.mxu0 0.0
          %952 = vmatpush1.xpose.msra.mxu0 %v948
          %953 = vmatprep.subr.mxu0 0.0
          %954 = vmatpush1.xpose.msra.mxu0 %v945
          %955 = vmatprep.subr.mxu0 0.0
          %956 = vmatpush1.xpose.msra.mxu0 0.0
          %957 = vmatprep.subr.mxu0 0.0
          %958 = vmatpush1.xpose.msra.mxu0 0.0
          %959 = vmatprep.subr.mxu0 0.0
          %960 = vmatpush1.xpose.msra.mxu0 0.0
          %961 = vmatprep.subr.mxu0 0.0
          %962 = vmatpush1.xpose.msra.mxu0 0.0
          %963 = vmatprep.subr.mxu0 0.0
          %964 = vmatpush1.xpose.msra.mxu0 0.0
          %965 = vmatprep.subr.mxu0 0.0
          %966 = vmatpush1.xpose.msra.mxu0 0.0
          %967 = vmatprep.subr.mxu0 0.0
          %968 = vmatpush1.xpose.msra.mxu0 0.0
          %969 = vmatprep.subr.mxu0 0.0
          %970 = vmatpush1.xpose.msra.mxu0 0.0
          %971 = vmatprep.subr.mxu0 0.0
          %972 = vmatpush1.xpose.msra.mxu0 0.0
          %973 = vmatprep.subr.mxu0 0.0
          %974 = vmatpush1.xpose.msra.mxu0 0.0
          %975 = vmatprep.subr.mxu0 0.0
          %976 = vmatpush1.xpose.msra.mxu0 0.0
          %977 = vmatprep.subr.mxu0 0.0
          %978 = vmatpush1.xpose.msra.mxu0 0.0
          %979 = vmatprep.subr.mxu0 0.0
          %980 = vmatpush1.xpose.msra.mxu0 0.0
          %981 = vmatprep.subr.mxu0 0.0
          %982 = vmatpush1.xpose.msra.mxu0 0.0
          %983 = vmatprep.subr.mxu0 0.0
          %984 = vmatpush1.xpose.msra.mxu0 0.0
          %985 = vmatprep.subr.mxu0 0.0
          %986 = vmatpush1.xpose.msra.mxu0 0.0
          %987 = vmatprep.subr.mxu0 0.0
          %988 = vmatpush1.xpose.msra.mxu0 0.0
          %989 = vmatprep.subr.mxu0 0.0
          %990 = vmatpush1.xpose.msra.mxu0 0.0
          %991 = vmatprep.subr.mxu0 0.0
          %992 = vmatpush1.xpose.msra.mxu0 0.0
          %993 = vmatprep.subr.mxu0 0.0
          %994 = vmatpush1.xpose.msra.mxu0 0.0
          %995 = vmatprep.subr.mxu0 0.0
          %996 = vmatpush1.xpose.msra.mxu0 0.0
          %997 = vmatprep.subr.mxu0 0.0
          %998 = vmatpush1.xpose.msra.mxu0 0.0
          %999 = vmatprep.subr.mxu0 0.0
          %1000 = vmatpush1.xpose.msra.mxu0 0.0
          %1001 = vmatprep.subr.mxu0 0.0
          %1002 = vmatpush1.xpose.msra.mxu0 0.0
          %1003 = vmatprep.subr.mxu0 0.0
          %1004 = vmatpush1.xpose.msra.mxu0 0.0
          %1005 = vmatprep.subr.mxu0 0.0
          %1006 = vmatpush1.xpose.msra.mxu0 0.0
          %1007 = vmatprep.subr.mxu0 0.0
          %1008 = vmatpush1.xpose.msra.mxu0 0.0
          %1009 = vmatprep.subr.mxu0 0.0
          %1010 = vmatpush1.xpose.msra.mxu0 0.0
          %1011 = vmatprep.subr.mxu0 0.0
          %1012 = vmatpush1.xpose.msra.mxu0 0.0
          %1013 = vmatprep.mubr.f32.mxu0 0.0
          %1014 = vmatmul.mubr.f32.gmra.mrb[0].mxu0 1.0
          %v1015 = vpop.f32.mrb[0].mxu0
          %v1016 = vadd.f32 0.0, %v1015
          %v1017 = vpop.f32.mrb[0].mxu0
          %1018 = vdwg.mxu0
          %vm1019 = vcmask 195584
          %v1020 = vsel %vm1019, %v1016, 0.0
          %v1021 = vld [vmem:[%s7] sm:$0x1]
          %v1022 = vadd.f32 %v1020, %v1021
          %1023 = vst [vmem:[%s10] sm:$0x1] %v1022
        $region68: #{model_forward.1} parent=59 // pred_fallthru
          _
        // Predicated region
        $region69: #{model_forward.1} parent=59 // pred_check
          %p1024 = pneg %p255
        $region70: #{model_forward.1} parent=59 // pred_check_branch
          %1026 = sbr.rel (%p1024) target = $region72
        $region71: #{model_forward.1} parent=59 // pred_region
          _
        $region72: #{model_forward.1} parent=59 // pred_fallthru
          _
        // Predicated region
        $region73: #{model_forward.1} parent=59 // pred_check
          %p1027 = pneg %p255
        $region74: #{model_forward.1} parent=59 // pred_check_branch
          %1029 = sbr.rel (%p1027) target = $region76
        $region75: #{model_forward.1} parent=59 // pred_region
          _
        $region76: #{model_forward.1} parent=59 // pred_fallthru
          _
      $region60: #{model_forward.1} parent=5 // pred_fallthru
        _
      %p1030 = scmp.le.s32.totalorder 2, %s17
      // Predicated region
      $region77: #{model_forward.1} parent=5 // pred_check
        %p1031 = pneg %p1030
      $region78: #{model_forward.1} parent=5 // pred_check_branch
        %1033 = sbr.rel (%p1031) target = $region80
      $region79: #{model_forward.1} parent=5 // pred_region
        %s1034 = ssub.s32 %s17, 2
      $region80: #{model_forward.1} parent=5 // pred_fallthru
        _
    $region6: #{model_forward.1} parent=1 // loop_footer
      %s21 = sadd.s32 1, %s17
    $region7: #{model_forward.1} parent=1 // loop_footer_branch
      %16 = sbr.rel target = $region3
    $region8: #{model_forward.1} parent=1 // loop_exit
      _
    %1035 = vsyncpa [#allocation6], 1
    %s1036 = scalar_lea.sflag [#allocation6], 1
    %1037 = vsyncpa %s1036, 1

</llo_original>
